<compile_context>
chip_gen: v7x
topology: tpu7x:2x2x1
jax: 0.10.0
libtpu: 0.0.40
codegen_flags: <defaults>
</compile_context>

<pallas_src>
import functools

import numpy as np
import jax
import jax.numpy as jnp
from jax import lax
from jax.experimental import pallas as pl
from jax.experimental.pallas import tpu as pltpu

EPS = 1e-5


def _resblock_kernel(x_ref, w_ref, gamma_ref, beta_ref, out_ref, *, N, H, W, C):
    """x_ref/out_ref: (N*H, W*C) lane-dense activations.
    w_ref: (3, W*C, W*C) per-H-tap weights (width taps + channel mix + implicit
           zero padding along W folded in).
    gamma_ref/beta_ref: (1, W*C) channel params tiled over W."""
    WC = W * C
    NH = N * H

    # Hoisted: loaded once, reused by both conv applications.
    w0 = w_ref[0]                        # (WC, WC)  tap kh=0 (reads input row h-1)
    w1 = w_ref[1]                        #           tap kh=1 (reads input row h)
    w2 = w_ref[2]                        #           tap kh=2 (reads input row h+1)
    g = gamma_ref[...]                   # (1, WC)
    b = beta_ref[...]                    # (1, WC)
    inv_n = np.float32(1.0 / (N * H * W))
    zrow = jnp.zeros((N, 1, WC), jnp.float32)

    def shift_rows_down(y):              # out[:, h, :] = y[:, h-1, :]; row 0 -> 0
        y3 = y.reshape(N, H, WC)
        return jnp.concatenate([zrow, y3[:, :H - 1, :]], axis=1).reshape(NH, WC)

    def shift_rows_up(y):                # out[:, h, :] = y[:, h+1, :]; row H-1 -> 0
        y3 = y.reshape(N, H, WC)
        return jnp.concatenate([y3[:, 1:, :], zrow], axis=1).reshape(NH, WC)

    def fold_lane_groups(v):             # (1, WC): sum the W lane groups so every
        shift = C                        # lane holds its channel's total.
        while shift < WC:                # log2(W) XLU lane rotations (free vs MXU).
            v = v + pltpu.roll(v, shift=shift, axis=1)
            shift *= 2
        return v

    def conv_bn_relu(a):                 # (NH, WC) f32 -> (NH, WC) f32
        # 3x3 conv as three accumulating lane-dense MXU matmuls (one per H tap):
        #   out[h] = a[h-1] @ w0 + a[h] @ w1 + a[h+1] @ w2   (per image, zero halo)
        y0 = jnp.dot(a, w0, preferred_element_type=jnp.float32)
        y1 = jnp.dot(a, w1, preferred_element_type=jnp.float32)
        y2 = jnp.dot(a, w2, preferred_element_type=jnp.float32)
        acc = y1 + shift_rows_down(y0) + shift_rows_up(y2)

        # BatchNorm2d, training-mode batch stats, two-pass centered variance.
        s = fold_lane_groups(jnp.sum(acc, axis=0, keepdims=True))
        mean = s * inv_n                                   # per-channel mean
        d = acc - mean
        ss = fold_lane_groups(jnp.sum(d * d, axis=0, keepdims=True))
        var = ss * inv_n                                   # biased batch variance
        scale = lax.rsqrt(var + EPS) * g                   # (1, WC)
        return jnp.maximum(d * scale + b, 0.0)             # BN affine + ReLU

    x = x_ref[...].astype(jnp.float32)   # (NH, WC)
    out1 = conv_bn_relu(x)               # self.conv(x)
    out2 = conv_bn_relu(out1)            # self.conv(out)  (same weights)
    out_ref[...] = (out2 + x).astype(out_ref.dtype)        # residual add


def resblock_forward(x_nchw, w_oihw, gamma, beta):
    N, C, H, W = x_nchw.shape
    WC = W * C
    assert W & (W - 1) == 0, "W must be a power of two for the lane-group fold"
    # The per-tap banded weight is ~3/W dense and O((W*C)^2) bytes; only use it
    # while W*C is small (demo: 128 == exactly one lane tile).
    assert WC <= 512, "switch to per-kw channel-mix matmuls for large W*C"

    # Lane-dense repack: NCHW -> (N*H, W*C) with the fused W*C on the lane axis.
    # (In a full network this layout should be carried between layers.)
    x2 = jnp.transpose(x_nchw, (0, 2, 3, 1)).reshape(N * H, WC)

    # Per-H-tap weights: fold the 3 width taps, the channel mix, and the
    # implicit zero padding in W into three (W*C, W*C) matmul operands.
    # w_taps[kh, w_in*C + ci, w_out*C + co] = K[kh, w_in - w_out + 1, ci, co]
    k_hwio = jnp.transpose(w_oihw, (2, 3, 1, 0)).astype(jnp.float32)  # (kh,kw,ci,co)
    sel = np.zeros((W, W, 3), np.float32)            # [w_in, w_out, kw]
    for w_in in range(W):
        for kw in range(3):
            w_out = w_in - kw + 1
            if 0 <= w_out < W:
                sel[w_in, w_out, kw] = 1.0
    w_taps = jnp.einsum('wvk,hkio->hwivo', jnp.asarray(sel), k_hwio)
    w_taps = w_taps.reshape(3, WC, WC)

    # Channel params tiled over W so they line up with lane index w*C + c.
    gamma_l = jnp.tile(gamma.astype(jnp.float32), W).reshape(1, WC)
    beta_l = jnp.tile(beta.astype(jnp.float32), W).reshape(1, WC)

    kernel = functools.partial(_resblock_kernel, N=N, H=H, W=W, C=C)

    # VMEM limit from the actual f32 live set (inputs + output + a few
    # activation-sized temporaries) with headroom, capped by the device's
    # physical VMEM capacity (generation aware).
    footprint_bytes = 4 * (x2.size + w_taps.size + 2 * WC   # inputs / params
                           + N * H * WC                     # output
                           + 6 * N * H * WC)                # in-flight temporaries
    try:
        vmem_cap = pltpu.get_tpu_info().vmem_capacity_bytes
    except Exception:                                       # pragma: no cover
        vmem_cap = 64 << 20
    vmem_limit = int(min(max(2 * footprint_bytes, 4 << 20), (vmem_cap * 3) // 4))

    out2d = pl.pallas_call(
        kernel,
        out_shape=jax.ShapeDtypeStruct((N * H, WC), x_nchw.dtype),
        in_specs=[pl.BlockSpec(memory_space=pltpu.MemorySpace.VMEM)] * 4,
        out_specs=pl.BlockSpec(memory_space=pltpu.MemorySpace.VMEM),
        compiler_params=pltpu.CompilerParams(vmem_limit_bytes=vmem_limit),
    )(x2, w_taps, gamma_l, beta_l)

    return jnp.transpose(out2d.reshape(N, H, W, C), (0, 3, 1, 2))


def resblock_reference(x_nchw, w_oihw, gamma, beta):
    """Pure-JAX reference mirroring the PyTorch forward (training-mode BN)."""
    def conv_bn_relu(x):
        y = lax.conv_general_dilated(
            x, w_oihw, window_strides=(1, 1), padding="SAME",
            dimension_numbers=("NCHW", "OIHW", "NCHW"))
        mean = jnp.mean(y, axis=(0, 2, 3), keepdims=True)
        var = jnp.mean((y - mean) ** 2, axis=(0, 2, 3), keepdims=True)
        y = (y - mean) * lax.rsqrt(var + EPS)
        y = y * gamma[None, :, None, None] + beta[None, :, None, None]
        return jnp.maximum(y, 0.0)

    out = conv_bn_relu(x_nchw)
    out = conv_bn_relu(out)
    return out + x_nchw


if __name__ == "__main__":
    # ResBlock residual add requires in_channels == out_channels.
    # W*C = 16*8 = 128 -> exactly one lane tile for the fused lane axis.
    N, C, H, W = 2, 8, 16, 16

    key = jax.random.PRNGKey(0)
    kx, kw, kg, kb = jax.random.split(key, 4)

    x = jax.random.normal(kx, (N, C, H, W), jnp.float32)
    w = jax.random.normal(kw, (C, C, 3, 3), jnp.float32) * 0.1   # Conv2d weight (OIHW, no bias)
    gamma = 0.5 + jax.random.uniform(kg, (C,), jnp.float32)      # BatchNorm2d weight
    beta = jax.random.normal(kb, (C,), jnp.float32) * 0.1        # BatchNorm2d bias

    out = jax.block_until_ready(resblock_forward(x, w, gamma, beta))
    ref = jax.block_until_ready(resblock_reference(x, w, gamma, beta))

    if not np.allclose(np.asarray(out), np.asarray(ref), rtol=1e-4, atol=1e-4):
        raise AssertionError("Pallas kernel does not match reference")

    print("KERNEL_OK")
</pallas_src>

<mosaic_0001>
module attributes {stable_mosaic.version = 11 : i64} {
  func.func @_resblock_kernel(%arg0: memref<32x128xf32, #tpu.memory_space<vmem>>, %arg1: memref<3x128x128xf32, #tpu.memory_space<vmem>>, %arg2: memref<1x128xf32, #tpu.memory_space<vmem>>, %arg3: memref<1x128xf32, #tpu.memory_space<vmem>>, %arg4: memref<32x128xf32, #tpu.memory_space<vmem>>) attributes {dimension_semantics = [], scalar_prefetch = 0 : i64, scratch_operands = 0 : i64, tpu.core_type = #tpu.core_type<tc>} {
    %c0 = arith.constant 0 : index
    %c0_0 = arith.constant 0 : index
    %c0_1 = arith.constant 0 : index
    %0 = vector.load %arg1[%c0, %c0_0, %c0_1] : memref<3x128x128xf32, #tpu.memory_space<vmem>>, vector<1x128x128xf32>
    %1 = vector.shape_cast %0 : vector<1x128x128xf32> to vector<128x128xf32>
    %c1 = arith.constant 1 : index
    %c0_2 = arith.constant 0 : index
    %c0_3 = arith.constant 0 : index
    %2 = vector.load %arg1[%c1, %c0_2, %c0_3] : memref<3x128x128xf32, #tpu.memory_space<vmem>>, vector<1x128x128xf32>
    %3 = vector.shape_cast %2 : vector<1x128x128xf32> to vector<128x128xf32>
    %c2 = arith.constant 2 : index
    %c0_4 = arith.constant 0 : index
    %c0_5 = arith.constant 0 : index
    %4 = vector.load %arg1[%c2, %c0_4, %c0_5] : memref<3x128x128xf32, #tpu.memory_space<vmem>>, vector<1x128x128xf32>
    %5 = vector.shape_cast %4 : vector<1x128x128xf32> to vector<128x128xf32>
    %c0_6 = arith.constant 0 : index
    %c0_7 = arith.constant 0 : index
    %6 = vector.load %arg2[%c0_6, %c0_7] : memref<1x128xf32, #tpu.memory_space<vmem>>, vector<1x128xf32>
    %c0_8 = arith.constant 0 : index
    %c0_9 = arith.constant 0 : index
    %7 = vector.load %arg3[%c0_8, %c0_9] : memref<1x128xf32, #tpu.memory_space<vmem>>, vector<1x128xf32>
    %cst = arith.constant 0.000000e+00 : f32
    %8 = vector.broadcast %cst : f32 to vector<2x1x128xf32>
    %c0_10 = arith.constant 0 : index
    %c0_11 = arith.constant 0 : index
    %9 = vector.load %arg0[%c0_10, %c0_11] : memref<32x128xf32, #tpu.memory_space<vmem>>, vector<32x128xf32>
    %cst_12 = arith.constant dense<0.000000e+00> : vector<32x128xf32>
    %10 = tpu.matmul %9, %1, %cst_12 {dimension_numbers = #tpu.dot_dimension_numbers<[1], [0], [0], [1], [0, 0, 1, 1], [], []>} : vector<32x128xf32>, vector<128x128xf32>, vector<32x128xf32> -> vector<32x128xf32>
    %cst_13 = arith.constant dense<0.000000e+00> : vector<32x128xf32>
    %11 = tpu.matmul %9, %3, %cst_13 {dimension_numbers = #tpu.dot_dimension_numbers<[1], [0], [0], [1], [0, 0, 1, 1], [], []>} : vector<32x128xf32>, vector<128x128xf32>, vector<32x128xf32> -> vector<32x128xf32>
    %cst_14 = arith.constant dense<0.000000e+00> : vector<32x128xf32>
    %12 = tpu.matmul %9, %5, %cst_14 {dimension_numbers = #tpu.dot_dimension_numbers<[1], [0], [0], [1], [0, 0, 1, 1], [], []>} : vector<32x128xf32>, vector<128x128xf32>, vector<32x128xf32> -> vector<32x128xf32>
    %13 = vector.shape_cast %10 : vector<32x128xf32> to vector<2x16x128xf32>
    %14 = vector.extract_strided_slice %13 {offsets = [0, 0, 0], sizes = [2, 15, 128], strides = [1, 1, 1]} : vector<2x16x128xf32> to vector<2x15x128xf32>
    %15 = tpu.concatenate %8, %14 in 1 : vector<2x1x128xf32>, vector<2x15x128xf32> -> vector<2x16x128xf32>
    %16 = vector.shape_cast %15 : vector<2x16x128xf32> to vector<32x128xf32>
    %17 = arith.addf %11, %16 : vector<32x128xf32>
    %18 = vector.shape_cast %12 : vector<32x128xf32> to vector<2x16x128xf32>
    %19 = vector.extract_strided_slice %18 {offsets = [0, 1, 0], sizes = [2, 15, 128], strides = [1, 1, 1]} : vector<2x16x128xf32> to vector<2x15x128xf32>
    %20 = tpu.concatenate %19, %8 in 1 : vector<2x15x128xf32>, vector<2x1x128xf32> -> vector<2x16x128xf32>
    %21 = vector.shape_cast %20 : vector<2x16x128xf32> to vector<32x128xf32>
    %22 = arith.addf %17, %21 : vector<32x128xf32>
    %cst_15 = arith.constant dense<0.000000e+00> : vector<128xf32>
    %23 = vector.multi_reduction <add>, %22, %cst_15 [0] : vector<32x128xf32> to vector<128xf32>
    %24 = vector.shape_cast %23 : vector<128xf32> to vector<1x128xf32>
    %c8_i32 = arith.constant 8 : i32
    %25 = tpu.dynamic_rotate %24 by %c8_i32 dim 1 : vector<1x128xf32>, i32 -> vector<1x128xf32>
    %26 = arith.addf %24, %25 : vector<1x128xf32>
    %c16_i32 = arith.constant 16 : i32
    %27 = tpu.dynamic_rotate %26 by %c16_i32 dim 1 : vector<1x128xf32>, i32 -> vector<1x128xf32>
    %28 = arith.addf %26, %27 : vector<1x128xf32>
    %c32_i32 = arith.constant 32 : i32
    %29 = tpu.dynamic_rotate %28 by %c32_i32 dim 1 : vector<1x128xf32>, i32 -> vector<1x128xf32>
    %30 = arith.addf %28, %29 : vector<1x128xf32>
    %c64_i32 = arith.constant 64 : i32
    %31 = tpu.dynamic_rotate %30 by %c64_i32 dim 1 : vector<1x128xf32>, i32 -> vector<1x128xf32>
    %32 = arith.addf %30, %31 : vector<1x128xf32>
    %cst_16 = arith.constant 0.001953125 : f32
    %33 = vector.broadcast %cst_16 : f32 to vector<1x128xf32>
    %34 = arith.mulf %32, %33 : vector<1x128xf32>
    %35 = vector.broadcast %34 : vector<1x128xf32> to vector<32x128xf32>
    %36 = arith.subf %22, %35 : vector<32x128xf32>
    %37 = arith.mulf %36, %36 : vector<32x128xf32>
    %cst_17 = arith.constant dense<0.000000e+00> : vector<128xf32>
    %38 = vector.multi_reduction <add>, %37, %cst_17 [0] : vector<32x128xf32> to vector<128xf32>
    %39 = vector.shape_cast %38 : vector<128xf32> to vector<1x128xf32>
    %c8_i32_18 = arith.constant 8 : i32
    %40 = tpu.dynamic_rotate %39 by %c8_i32_18 dim 1 : vector<1x128xf32>, i32 -> vector<1x128xf32>
    %41 = arith.addf %39, %40 : vector<1x128xf32>
    %c16_i32_19 = arith.constant 16 : i32
    %42 = tpu.dynamic_rotate %41 by %c16_i32_19 dim 1 : vector<1x128xf32>, i32 -> vector<1x128xf32>
    %43 = arith.addf %41, %42 : vector<1x128xf32>
    %c32_i32_20 = arith.constant 32 : i32
    %44 = tpu.dynamic_rotate %43 by %c32_i32_20 dim 1 : vector<1x128xf32>, i32 -> vector<1x128xf32>
    %45 = arith.addf %43, %44 : vector<1x128xf32>
    %c64_i32_21 = arith.constant 64 : i32
    %46 = tpu.dynamic_rotate %45 by %c64_i32_21 dim 1 : vector<1x128xf32>, i32 -> vector<1x128xf32>
    %47 = arith.addf %45, %46 : vector<1x128xf32>
    %cst_22 = arith.constant 0.001953125 : f32
    %48 = vector.broadcast %cst_22 : f32 to vector<1x128xf32>
    %49 = arith.mulf %47, %48 : vector<1x128xf32>
    %cst_23 = arith.constant 9.99999974E-6 : f32
    %50 = vector.broadcast %cst_23 : f32 to vector<1x128xf32>
    %51 = arith.addf %49, %50 : vector<1x128xf32>
    %52 = math.rsqrt %51 : vector<1x128xf32>
    %53 = arith.mulf %52, %6 : vector<1x128xf32>
    %54 = vector.broadcast %53 : vector<1x128xf32> to vector<32x128xf32>
    %55 = arith.mulf %36, %54 : vector<32x128xf32>
    %56 = vector.broadcast %7 : vector<1x128xf32> to vector<32x128xf32>
    %57 = arith.addf %55, %56 : vector<32x128xf32>
    %cst_24 = arith.constant 0.000000e+00 : f32
    %58 = vector.broadcast %cst_24 : f32 to vector<32x128xf32>
    %59 = arith.maximumf %57, %58 : vector<32x128xf32>
    %cst_25 = arith.constant dense<0.000000e+00> : vector<32x128xf32>
    %60 = tpu.matmul %59, %1, %cst_25 {dimension_numbers = #tpu.dot_dimension_numbers<[1], [0], [0], [1], [0, 0, 1, 1], [], []>} : vector<32x128xf32>, vector<128x128xf32>, vector<32x128xf32> -> vector<32x128xf32>
    %cst_26 = arith.constant dense<0.000000e+00> : vector<32x128xf32>
    %61 = tpu.matmul %59, %3, %cst_26 {dimension_numbers = #tpu.dot_dimension_numbers<[1], [0], [0], [1], [0, 0, 1, 1], [], []>} : vector<32x128xf32>, vector<128x128xf32>, vector<32x128xf32> -> vector<32x128xf32>
    %cst_27 = arith.constant dense<0.000000e+00> : vector<32x128xf32>
    %62 = tpu.matmul %59, %5, %cst_27 {dimension_numbers = #tpu.dot_dimension_numbers<[1], [0], [0], [1], [0, 0, 1, 1], [], []>} : vector<32x128xf32>, vector<128x128xf32>, vector<32x128xf32> -> vector<32x128xf32>
    %63 = vector.shape_cast %60 : vector<32x128xf32> to vector<2x16x128xf32>
    %64 = vector.extract_strided_slice %63 {offsets = [0, 0, 0], sizes = [2, 15, 128], strides = [1, 1, 1]} : vector<2x16x128xf32> to vector<2x15x128xf32>
    %65 = tpu.concatenate %8, %64 in 1 : vector<2x1x128xf32>, vector<2x15x128xf32> -> vector<2x16x128xf32>
    %66 = vector.shape_cast %65 : vector<2x16x128xf32> to vector<32x128xf32>
    %67 = arith.addf %61, %66 : vector<32x128xf32>
    %68 = vector.shape_cast %62 : vector<32x128xf32> to vector<2x16x128xf32>
    %69 = vector.extract_strided_slice %68 {offsets = [0, 1, 0], sizes = [2, 15, 128], strides = [1, 1, 1]} : vector<2x16x128xf32> to vector<2x15x128xf32>
    %70 = tpu.concatenate %69, %8 in 1 : vector<2x15x128xf32>, vector<2x1x128xf32> -> vector<2x16x128xf32>
    %71 = vector.shape_cast %70 : vector<2x16x128xf32> to vector<32x128xf32>
    %72 = arith.addf %67, %71 : vector<32x128xf32>
    %cst_28 = arith.constant dense<0.000000e+00> : vector<128xf32>
    %73 = vector.multi_reduction <add>, %72, %cst_28 [0] : vector<32x128xf32> to vector<128xf32>
    %74 = vector.shape_cast %73 : vector<128xf32> to vector<1x128xf32>
    %c8_i32_29 = arith.constant 8 : i32
    %75 = tpu.dynamic_rotate %74 by %c8_i32_29 dim 1 : vector<1x128xf32>, i32 -> vector<1x128xf32>
    %76 = arith.addf %74, %75 : vector<1x128xf32>
    %c16_i32_30 = arith.constant 16 : i32
    %77 = tpu.dynamic_rotate %76 by %c16_i32_30 dim 1 : vector<1x128xf32>, i32 -> vector<1x128xf32>
    %78 = arith.addf %76, %77 : vector<1x128xf32>
    %c32_i32_31 = arith.constant 32 : i32
    %79 = tpu.dynamic_rotate %78 by %c32_i32_31 dim 1 : vector<1x128xf32>, i32 -> vector<1x128xf32>
    %80 = arith.addf %78, %79 : vector<1x128xf32>
    %c64_i32_32 = arith.constant 64 : i32
    %81 = tpu.dynamic_rotate %80 by %c64_i32_32 dim 1 : vector<1x128xf32>, i32 -> vector<1x128xf32>
    %82 = arith.addf %80, %81 : vector<1x128xf32>
    %cst_33 = arith.constant 0.001953125 : f32
    %83 = vector.broadcast %cst_33 : f32 to vector<1x128xf32>
    %84 = arith.mulf %82, %83 : vector<1x128xf32>
    %85 = vector.broadcast %84 : vector<1x128xf32> to vector<32x128xf32>
    %86 = arith.subf %72, %85 : vector<32x128xf32>
    %87 = arith.mulf %86, %86 : vector<32x128xf32>
    %cst_34 = arith.constant dense<0.000000e+00> : vector<128xf32>
    %88 = vector.multi_reduction <add>, %87, %cst_34 [0] : vector<32x128xf32> to vector<128xf32>
    %89 = vector.shape_cast %88 : vector<128xf32> to vector<1x128xf32>
    %c8_i32_35 = arith.constant 8 : i32
    %90 = tpu.dynamic_rotate %89 by %c8_i32_35 dim 1 : vector<1x128xf32>, i32 -> vector<1x128xf32>
    %91 = arith.addf %89, %90 : vector<1x128xf32>
    %c16_i32_36 = arith.constant 16 : i32
    %92 = tpu.dynamic_rotate %91 by %c16_i32_36 dim 1 : vector<1x128xf32>, i32 -> vector<1x128xf32>
    %93 = arith.addf %91, %92 : vector<1x128xf32>
    %c32_i32_37 = arith.constant 32 : i32
    %94 = tpu.dynamic_rotate %93 by %c32_i32_37 dim 1 : vector<1x128xf32>, i32 -> vector<1x128xf32>
    %95 = arith.addf %93, %94 : vector<1x128xf32>
    %c64_i32_38 = arith.constant 64 : i32
    %96 = tpu.dynamic_rotate %95 by %c64_i32_38 dim 1 : vector<1x128xf32>, i32 -> vector<1x128xf32>
    %97 = arith.addf %95, %96 : vector<1x128xf32>
    %cst_39 = arith.constant 0.001953125 : f32
    %98 = vector.broadcast %cst_39 : f32 to vector<1x128xf32>
    %99 = arith.mulf %97, %98 : vector<1x128xf32>
    %cst_40 = arith.constant 9.99999974E-6 : f32
    %100 = vector.broadcast %cst_40 : f32 to vector<1x128xf32>
    %101 = arith.addf %99, %100 : vector<1x128xf32>
    %102 = math.rsqrt %101 : vector<1x128xf32>
    %103 = arith.mulf %102, %6 : vector<1x128xf32>
    %104 = vector.broadcast %103 : vector<1x128xf32> to vector<32x128xf32>
    %105 = arith.mulf %86, %104 : vector<32x128xf32>
    %106 = vector.broadcast %7 : vector<1x128xf32> to vector<32x128xf32>
    %107 = arith.addf %105, %106 : vector<32x128xf32>
    %cst_41 = arith.constant 0.000000e+00 : f32
    %108 = vector.broadcast %cst_41 : f32 to vector<32x128xf32>
    %109 = arith.maximumf %107, %108 : vector<32x128xf32>
    %110 = arith.addf %109, %9 : vector<32x128xf32>
    %c0_42 = arith.constant 0 : index
    %c0_43 = arith.constant 0 : index
    %111 = vector.load %arg4[%c0_42, %c0_43] : memref<32x128xf32, #tpu.memory_space<vmem>>, vector<32x128xf32>
    tpu.vector_store %arg4[%c0_42, %c0_43], %110 {strides = array<i32>} : memref<32x128xf32, #tpu.memory_space<vmem>>, vector<32x128xf32>,
    return
  }
}

</mosaic_0001>

<llo_original>
// kernel: tpu_custom_call.1
$region0: #{tpu_custom_call.1}
  #allocation0 [shape = 'u32[]', space=smem, size = 0x4, offset = 0x4, fixed_abs, tag = 'smem constant byte address 0x4 - core index']
  #allocation1 [shape = 'u32[144,128]{1,0:T(1,128)}', space=vmem, size = 0x12000, scoped, tag = 'internal scratch']
  %s0 = inlined_call_operand.hbm [shape: f32[32,128], index: 0, kind: input, shape index: {}]
  %s1 = inlined_call_operand.hbm [shape: f32[3,128,128], index: 1, kind: input, shape index: {}]
  %s2 = inlined_call_operand.vmem [shape: f32[1,128], index: 2, kind: input, shape index: {}]
  %s3 = inlined_call_operand.vmem [shape: f32[1,128], index: 3, kind: input, shape index: {}]
  %s4 = inlined_call_operand.hbm [shape: f32[32,128], index: 4, kind: output, shape index: {}]
  %s5 = sld [smem:[#allocation0]]
  $region34: #{tpu_custom_call.1} parent=0
    _
  %s7 = ssub.s32 1, %s5
  %s8 = scalar_select 0, %s7, %s5
  $region1: #{tpu_custom_call.1} parent=0
    #allocation2 [shape = 'u8[16384]{0}', space=vmem, size = 0x4000, scoped, tag = 'input window, operand 0, single buffered']
    #allocation3 [shape = 's32[1]{0}', space=sflag, size = 0x4, scoped, tag = 'scoped memory for tpu_custom_call.1']
    #allocation4 [shape = 's32[1]{0}', space=sflag, size = 0x4, scoped, tag = 'scoped memory for tpu_custom_call.1']
    #allocation5 [shape = 'u8[196608]{0}', space=vmem, size = 0x30000, scoped, tag = 'input window, operand 1, single buffered']
    #allocation6 [shape = 's32[1]{0}', space=sflag, size = 0x4, scoped, tag = 'scoped memory for tpu_custom_call.1']
    #allocation7 [shape = 'u8[16384]{0}', space=vmem, size = 0x4000, scoped, tag = 'output window, operand 0, single buffered']
    %9 = vsyncpa [#allocation3], 0
    %10 = vsyncpa [#allocation6], 0
    %11 = vsyncpa [#allocation4], 0
    // Predicated region
    $region2: #{tpu_custom_call.1} parent=1 // pred_check
      _
    $region3: #{tpu_custom_call.1} parent=1 // pred_check_branch
      %13 = sbr.rel (0) target = $region5
    $region4: #{tpu_custom_call.1} parent=1 // pred_region
      %s15 = ssub.s32 512, 512
      %16 = vsyncadd [#allocation3], %s15
      %s17 = sshll.u32 [#allocation2], 4
      %s18 = int_to_ptr.vmem [resolvable:$true] %s17
      %23 = dma.hbm_to_vmem [thread:$0]  %s0, 512, %s18, [#allocation3], 128, 128, 8
    $region5: #{tpu_custom_call.1} parent=1 // pred_fallthru
      _
    // Predicated region
    $region6: #{tpu_custom_call.1} parent=1 // pred_check
      _
    $region7: #{tpu_custom_call.1} parent=1 // pred_check_branch
      %25 = sbr.rel (0) target = $region9
    $region8: #{tpu_custom_call.1} parent=1 // pred_region
      %s27 = ssub.s32 6144, 6144
      %28 = vsyncadd [#allocation6], %s27
      %s29 = sshll.u32 [#allocation5], 4
      %s30 = int_to_ptr.vmem [resolvable:$true] %s29
      %35 = dma.hbm_to_vmem [thread:$0]  %s1, 6144, %s30, [#allocation6], 128, 128, 8
    $region9: #{tpu_custom_call.1} parent=1 // pred_fallthru
      _
    // Predicated region
    $region10: #{tpu_custom_call.1} parent=1 // pred_check
      _
    $region11: #{tpu_custom_call.1} parent=1 // pred_check_branch
      %37 = sbr.rel (0) target = $region13
    $region12: #{tpu_custom_call.1} parent=1 // pred_region
      _
    $region13: #{tpu_custom_call.1} parent=1 // pred_fallthru
      _
    // Predicated region
    $region14: #{tpu_custom_call.1} parent=1 // pred_check
      _
    $region15: #{tpu_custom_call.1} parent=1 // pred_check_branch
      %39 = sbr.rel (0) target = $region17
    $region16: #{tpu_custom_call.1} parent=1 // pred_region
      _
    $region17: #{tpu_custom_call.1} parent=1 // pred_fallthru
      _
    // Predicated region
    $region18: #{tpu_custom_call.1} parent=1 // pred_check
      _
    $region19: #{tpu_custom_call.1} parent=1 // pred_check_branch
      %41 = sbr.rel (0) target = $region21
    $region20: #{tpu_custom_call.1} parent=1 // pred_region
      %42 = dma.done [#allocation3], 512
    $region21: #{tpu_custom_call.1} parent=1 // pred_fallthru
      _
    // Predicated region
    $region22: #{tpu_custom_call.1} parent=1 // pred_check
      _
    $region23: #{tpu_custom_call.1} parent=1 // pred_check_branch
      %44 = sbr.rel (0) target = $region25
    $region24: #{tpu_custom_call.1} parent=1 // pred_region
      %45 = dma.done [#allocation6], 6144
    $region25: #{tpu_custom_call.1} parent=1 // pred_fallthru
      _
    %v46 = vld [vmem:[#allocation5] sm:$0xff]
    %v47 = vld [vmem:[#allocation5 + $0x8] sm:$0xff]
    %v48 = vld [vmem:[#allocation5 + $0x10] sm:$0xff]
    %v49 = vld [vmem:[#allocation5 + $0x18] sm:$0xff]
    %v50 = vld [vmem:[#allocation5 + $0x20] sm:$0xff]
    %v51 = vld [vmem:[#allocation5 + $0x28] sm:$0xff]
    %v52 = vld [vmem:[#allocation5 + $0x30] sm:$0xff]
    %v53 = vld [vmem:[#allocation5 + $0x38] sm:$0xff]
    %v54 = vld [vmem:[#allocation5 + $0x40] sm:$0xff]
    %v55 = vld [vmem:[#allocation5 + $0x48] sm:$0xff]
    %v56 = vld [vmem:[#allocation5 + $0x50] sm:$0xff]
    %v57 = vld [vmem:[#allocation5 + $0x58] sm:$0xff]
    %v58 = vld [vmem:[#allocation5 + $0x60] sm:$0xff]
    %v59 = vld [vmem:[#allocation5 + $0x68] sm:$0xff]
    %v60 = vld [vmem:[#allocation5 + $0x70] sm:$0xff]
    %v61 = vld [vmem:[#allocation5 + $0x78] sm:$0xff]
    %s62 = scalar_lea.vmem [#allocation5], 128
    %v63 = vld [vmem:[%s62] sm:$0xff]
    %v64 = vld [vmem:[%s62 + $0x8] sm:$0xff]
    %v65 = vld [vmem:[%s62 + $0x10] sm:$0xff]
    %v66 = vld [vmem:[%s62 + $0x18] sm:$0xff]
    %v67 = vld [vmem:[%s62 + $0x20] sm:$0xff]
    %v68 = vld [vmem:[%s62 + $0x28] sm:$0xff]
    %v69 = vld [vmem:[%s62 + $0x30] sm:$0xff]
    %v70 = vld [vmem:[%s62 + $0x38] sm:$0xff]
    %v71 = vld [vmem:[%s62 + $0x40] sm:$0xff]
    %v72 = vld [vmem:[%s62 + $0x48] sm:$0xff]
    %v73 = vld [vmem:[%s62 + $0x50] sm:$0xff]
    %v74 = vld [vmem:[%s62 + $0x58] sm:$0xff]
    %v75 = vld [vmem:[%s62 + $0x60] sm:$0xff]
    %v76 = vld [vmem:[%s62 + $0x68] sm:$0xff]
    %v77 = vld [vmem:[%s62 + $0x70] sm:$0xff]
    %v78 = vld [vmem:[%s62 + $0x78] sm:$0xff]
    %s79 = scalar_lea.vmem [#allocation5], 256
    %v80 = vld [vmem:[%s79] sm:$0xff]
    %v81 = vld [vmem:[%s79 + $0x8] sm:$0xff]
    %v82 = vld [vmem:[%s79 + $0x10] sm:$0xff]
    %v83 = vld [vmem:[%s79 + $0x18] sm:$0xff]
    %v84 = vld [vmem:[%s79 + $0x20] sm:$0xff]
    %v85 = vld [vmem:[%s79 + $0x28] sm:$0xff]
    %v86 = vld [vmem:[%s79 + $0x30] sm:$0xff]
    %v87 = vld [vmem:[%s79 + $0x38] sm:$0xff]
    %v88 = vld [vmem:[%s79 + $0x40] sm:$0xff]
    %v89 = vld [vmem:[%s79 + $0x48] sm:$0xff]
    %v90 = vld [vmem:[%s79 + $0x50] sm:$0xff]
    %v91 = vld [vmem:[%s79 + $0x58] sm:$0xff]
    %v92 = vld [vmem:[%s79 + $0x60] sm:$0xff]
    %v93 = vld [vmem:[%s79 + $0x68] sm:$0xff]
    %v94 = vld [vmem:[%s79 + $0x70] sm:$0xff]
    %v95 = vld [vmem:[%s79 + $0x78] sm:$0xff]
    %v96 = vld [vmem:[%s2] sm:$0x1]
    %v97 = vld [vmem:[%s3] sm:$0x1]
    %v98 = vld [vmem:[#allocation2] sm:$0xff]
    %v99 = vld [vmem:[#allocation2 + $0x8] sm:$0xff]
    %v100 = vld [vmem:[#allocation2 + $0x10] sm:$0xff]
    %v101 = vld [vmem:[#allocation2 + $0x18] sm:$0xff]
    %102 = vmatprep.subr.mxu0 0.0
    %103 = vmatpush1.msra.mxu0 %v46
    %104 = vmatprep.subr.mxu0 0.0
    %105 = vmatpush1.msra.mxu0 %v47
    %106 = vmatprep.subr.mxu0 0.0
    %107 = vmatpush1.msra.mxu0 %v48
    %108 = vmatprep.subr.mxu0 0.0
    %109 = vmatpush1.msra.mxu0 %v49
    %110 = vmatprep.subr.mxu0 0.0
    %111 = vmatpush1.msra.mxu0 %v50
    %112 = vmatprep.subr.mxu0 0.0
    %113 = vmatpush1.msra.mxu0 %v51
    %114 = vmatprep.subr.mxu0 0.0
    %115 = vmatpush1.msra.mxu0 %v52
    %116 = vmatprep.subr.mxu0 0.0
    %117 = vmatpush1.msra.mxu0 %v53
    %118 = vmatprep.subr.mxu0 0.0
    %119 = vmatpush1.msra.mxu0 %v54
    %120 = vmatprep.subr.mxu0 0.0
    %121 = vmatpush1.msra.mxu0 %v55
    %122 = vmatprep.subr.mxu0 0.0
    %123 = vmatpush1.msra.mxu0 %v56
    %124 = vmatprep.subr.mxu0 0.0
    %125 = vmatpush1.msra.mxu0 %v57
    %126 = vmatprep.subr.mxu0 0.0
    %127 = vmatpush1.msra.mxu0 %v58
    %128 = vmatprep.subr.mxu0 0.0
    %129 = vmatpush1.msra.mxu0 %v59
    %130 = vmatprep.subr.mxu0 0.0
    %131 = vmatpush1.msra.mxu0 %v60
    %132 = vmatprep.subr.mxu0 0.0
    %133 = vmatpush1.msra.mxu0 %v61
    %134 = vmatprep.subr.mxu0 0.0
    %135 = vmatpush1.msra.mxu0 0.0
    %136 = vmatprep.subr.mxu0 0.0
    %137 = vmatpush1.msra.mxu0 0.0
    %138 = vmatprep.subr.mxu0 0.0
    %139 = vmatpush1.msra.mxu0 0.0
    %140 = vmatprep.subr.mxu0 0.0
    %141 = vmatpush1.msra.mxu0 0.0
    %142 = vmatprep.subr.mxu0 0.0
    %143 = vmatpush1.msra.mxu0 0.0
    %144 = vmatprep.subr.mxu0 0.0
    %145 = vmatpush1.msra.mxu0 0.0
    %146 = vmatprep.subr.mxu0 0.0
    %147 = vmatpush1.msra.mxu0 0.0
    %148 = vmatprep.subr.mxu0 0.0
    %149 = vmatpush1.msra.mxu0 0.0
    %150 = vmatprep.subr.mxu0 0.0
    %151 = vmatpush1.msra.mxu0 0.0
    %152 = vmatprep.subr.mxu0 0.0
    %153 = vmatpush1.msra.mxu0 0.0
    %154 = vmatprep.subr.mxu0 0.0
    %155 = vmatpush1.msra.mxu0 0.0
    %156 = vmatprep.subr.mxu0 0.0
    %157 = vmatpush1.msra.mxu0 0.0
    %158 = vmatprep.subr.mxu0 0.0
    %159 = vmatpush1.msra.mxu0 0.0
    %160 = vmatprep.subr.mxu0 0.0
    %161 = vmatpush1.msra.mxu0 0.0
    %162 = vmatprep.subr.mxu0 0.0
    %163 = vmatpush1.msra.mxu0 0.0
    %164 = vmatprep.subr.mxu0 0.0
    %165 = vmatpush1.msra.mxu0 0.0
    %166 = vmatprep.mubr.f32.mxu0 0.0
    %167 = vmatmul.mubr.f32.gmra.mrb[0].mxu0 %v98
    %v168 = vpop.f32.mrb[0].mxu0
    %v169 = vadd.f32 0.0, %v168
    %v170 = vpop.f32.mrb[0].mxu0
    %171 = vmatprep.mubr.f32.mxu0 0.0
    %172 = vmatmul.mubr.f32.gmra.mrb[0].mxu0 %v99
    %v173 = vpop.f32.mrb[0].mxu0
    %v174 = vadd.f32 0.0, %v173
    %v175 = vpop.f32.mrb[0].mxu0
    %176 = vmatprep.mubr.f32.mxu0 0.0
    %177 = vmatmul.mubr.f32.gmra.mrb[0].mxu0 %v100
    %v178 = vpop.f32.mrb[0].mxu0
    %v179 = vadd.f32 0.0, %v178
    %v180 = vpop.f32.mrb[0].mxu0
    %181 = vmatprep.mubr.f32.mxu0 0.0
    %182 = vmatmul.mubr.f32.gmra.mrb[0].mxu0 %v101
    %v183 = vpop.f32.mrb[0].mxu0
    %v184 = vadd.f32 0.0, %v183
    %v185 = vpop.f32.mrb[0].mxu0
    %186 = vdwg.mxu0
    %187 = vmatprep.subr.mxu0 0.0
    %188 = vmatpush1.msra.mxu0 %v80
    %189 = vmatprep.subr.mxu0 0.0
    %190 = vmatpush1.msra.mxu0 %v81
    %191 = vmatprep.subr.mxu0 0.0
    %192 = vmatpush1.msra.mxu0 %v82
    %193 = vmatprep.subr.mxu0 0.0
    %194 = vmatpush1.msra.mxu0 %v83
    %195 = vmatprep.subr.mxu0 0.0
    %196 = vmatpush1.msra.mxu0 %v84
    %197 = vmatprep.subr.mxu0 0.0
    %198 = vmatpush1.msra.mxu0 %v85
    %199 = vmatprep.subr.mxu0 0.0
    %200 = vmatpush1.msra.mxu0 %v86
    %201 = vmatprep.subr.mxu0 0.0
    %202 = vmatpush1.msra.mxu0 %v87
    %203 = vmatprep.subr.mxu0 0.0
    %204 = vmatpush1.msra.mxu0 %v88
    %205 = vmatprep.subr.mxu0 0.0
    %206 = vmatpush1.msra.mxu0 %v89
    %207 = vmatprep.subr.mxu0 0.0
    %208 = vmatpush1.msra.mxu0 %v90
    %209 = vmatprep.subr.mxu0 0.0
    %210 = vmatpush1.msra.mxu0 %v91
    %211 = vmatprep.subr.mxu0 0.0
    %212 = vmatpush1.msra.mxu0 %v92
    %213 = vmatprep.subr.mxu0 0.0
    %214 = vmatpush1.msra.mxu0 %v93
    %215 = vmatprep.subr.mxu0 0.0
    %216 = vmatpush1.msra.mxu0 %v94
    %217 = vmatprep.subr.mxu0 0.0
    %218 = vmatpush1.msra.mxu0 %v95
    %219 = vmatprep.subr.mxu0 0.0
    %220 = vmatpush1.msra.mxu0 0.0
    %221 = vmatprep.subr.mxu0 0.0
    %222 = vmatpush1.msra.mxu0 0.0
    %223 = vmatprep.subr.mxu0 0.0
    %224 = vmatpush1.msra.mxu0 0.0
    %225 = vmatprep.subr.mxu0 0.0
    %226 = vmatpush1.msra.mxu0 0.0
    %227 = vmatprep.subr.mxu0 0.0
    %228 = vmatpush1.msra.mxu0 0.0
    %229 = vmatprep.subr.mxu0 0.0
    %230 = vmatpush1.msra.mxu0 0.0
    %231 = vmatprep.subr.mxu0 0.0
    %232 = vmatpush1.msra.mxu0 0.0
    %233 = vmatprep.subr.mxu0 0.0
    %234 = vmatpush1.msra.mxu0 0.0
    %235 = vmatprep.subr.mxu0 0.0
    %236 = vmatpush1.msra.mxu0 0.0
    %237 = vmatprep.subr.mxu0 0.0
    %238 = vmatpush1.msra.mxu0 0.0
    %239 = vmatprep.subr.mxu0 0.0
    %240 = vmatpush1.msra.mxu0 0.0
    %241 = vmatprep.subr.mxu0 0.0
    %242 = vmatpush1.msra.mxu0 0.0
    %243 = vmatprep.subr.mxu0 0.0
    %244 = vmatpush1.msra.mxu0 0.0
    %245 = vmatprep.subr.mxu0 0.0
    %246 = vmatpush1.msra.mxu0 0.0
    %247 = vmatprep.subr.mxu0 0.0
    %248 = vmatpush1.msra.mxu0 0.0
    %249 = vmatprep.subr.mxu0 0.0
    %250 = vmatpush1.msra.mxu0 0.0
    %251 = vmatprep.mubr.f32.mxu0 0.0
    %252 = vmatmul.mubr.f32.gmra.mrb[0].mxu0 %v98
    %v253 = vpop.f32.mrb[0].mxu0
    %v254 = vadd.f32 0.0, %v253
    %v255 = vpop.f32.mrb[0].mxu0
    %256 = vmatprep.mubr.f32.mxu0 0.0
    %257 = vmatmul.mubr.f32.gmra.mrb[0].mxu0 %v99
    %v258 = vpop.f32.mrb[0].mxu0
    %v259 = vadd.f32 0.0, %v258
    %v260 = vpop.f32.mrb[0].mxu0
    %261 = vmatprep.mubr.f32.mxu0 0.0
    %262 = vmatmul.mubr.f32.gmra.mrb[0].mxu0 %v100
    %v263 = vpop.f32.mrb[0].mxu0
    %v264 = vadd.f32 0.0, %v263
    %v265 = vpop.f32.mrb[0].mxu0
    %266 = vmatprep.mubr.f32.mxu0 0.0
    %267 = vmatmul.mubr.f32.gmra.mrb[0].mxu0 %v101
    %v268 = vpop.f32.mrb[0].mxu0
    %v269 = vadd.f32 0.0, %v268
    %v270 = vpop.f32.mrb[0].mxu0
    %271 = vdwg.mxu0
    %vm276 = vcmask 1040384
    %v277 = vrot.slane %v169, 7
    %v278 = vrot.slane %v174, 7
    %v279 = vsel %vm276, %v277, %v278
    %v280 = vrot.slane %v179, 7
    %v281 = vrot.slane %v184, 7
    %v282 = vsel %vm276, %v280, %v281
    %v287 = vsel %vm276, 0.0, %v277
    %v288 = vsel %vm276, 0.0, %v280
    %289 = vmatprep.subr.mxu0 0.0
    %290 = vmatpush1.msra.mxu0 %v63
    %291 = vmatprep.subr.mxu0 0.0
    %292 = vmatpush1.msra.mxu0 %v64
    %293 = vmatprep.subr.mxu0 0.0
    %294 = vmatpush1.msra.mxu0 %v65
    %295 = vmatprep.subr.mxu0 0.0
    %296 = vmatpush1.msra.mxu0 %v66
    %297 = vmatprep.subr.mxu0 0.0
    %298 = vmatpush1.msra.mxu0 %v67
    %299 = vmatprep.subr.mxu0 0.0
    %300 = vmatpush1.msra.mxu0 %v68
    %301 = vmatprep.subr.mxu0 0.0
    %302 = vmatpush1.msra.mxu0 %v69
    %303 = vmatprep.subr.mxu0 0.0
    %304 = vmatpush1.msra.mxu0 %v70
    %305 = vmatprep.subr.mxu0 0.0
    %306 = vmatpush1.msra.mxu0 %v71
    %307 = vmatprep.subr.mxu0 0.0
    %308 = vmatpush1.msra.mxu0 %v72
    %309 = vmatprep.subr.mxu0 0.0
    %310 = vmatpush1.msra.mxu0 %v73
    %311 = vmatprep.subr.mxu0 0.0
    %312 = vmatpush1.msra.mxu0 %v74
    %313 = vmatprep.subr.mxu0 0.0
    %314 = vmatpush1.msra.mxu0 %v75
    %315 = vmatprep.subr.mxu0 0.0
    %316 = vmatpush1.msra.mxu0 %v76
    %317 = vmatprep.subr.mxu0 0.0
    %318 = vmatpush1.msra.mxu0 %v77
    %319 = vmatprep.subr.mxu0 0.0
    %320 = vmatpush1.msra.mxu0 %v78
    %321 = vmatprep.subr.mxu0 0.0
    %322 = vmatpush1.msra.mxu0 0.0
    %323 = vmatprep.subr.mxu0 0.0
    %324 = vmatpush1.msra.mxu0 0.0
    %325 = vmatprep.subr.mxu0 0.0
    %326 = vmatpush1.msra.mxu0 0.0
    %327 = vmatprep.subr.mxu0 0.0
    %328 = vmatpush1.msra.mxu0 0.0
    %329 = vmatprep.subr.mxu0 0.0
    %330 = vmatpush1.msra.mxu0 0.0
    %331 = vmatprep.subr.mxu0 0.0
    %332 = vmatpush1.msra.mxu0 0.0
    %333 = vmatprep.subr.mxu0 0.0
    %334 = vmatpush1.msra.mxu0 0.0
    %335 = vmatprep.subr.mxu0 0.0
    %336 = vmatpush1.msra.mxu0 0.0
    %337 = vmatprep.subr.mxu0 0.0
    %338 = vmatpush1.msra.mxu0 0.0
    %339 = vmatprep.subr.mxu0 0.0
    %340 = vmatpush1.msra.mxu0 0.0
    %341 = vmatprep.subr.mxu0 0.0
    %342 = vmatpush1.msra.mxu0 0.0
    %343 = vmatprep.subr.mxu0 0.0
    %344 = vmatpush1.msra.mxu0 0.0
    %345 = vmatprep.subr.mxu0 0.0
    %346 = vmatpush1.msra.mxu0 0.0
    %347 = vmatprep.subr.mxu0 0.0
    %348 = vmatpush1.msra.mxu0 0.0
    %349 = vmatprep.subr.mxu0 0.0
    %350 = vmatpush1.msra.mxu0 0.0
    %351 = vmatprep.subr.mxu0 0.0
    %352 = vmatpush1.msra.mxu0 0.0
    %353 = vmatprep.mubr.f32.mxu0 0.0
    %354 = vmatmul.mubr.f32.gmra.mrb[0].mxu0 %v98
    %v355 = vpop.f32.mrb[0].mxu0
    %v356 = vadd.f32 %v287, %v355
    %v357 = vpop.f32.mrb[0].mxu0
    %358 = vmatprep.mubr.f32.mxu0 0.0
    %359 = vmatmul.mubr.f32.gmra.mrb[0].mxu0 %v99
    %v360 = vpop.f32.mrb[0].mxu0
    %v361 = vadd.f32 %v279, %v360
    %v362 = vpop.f32.mrb[0].mxu0
    %363 = vmatprep.mubr.f32.mxu0 0.0
    %364 = vmatmul.mubr.f32.gmra.mrb[0].mxu0 %v100
    %v365 = vpop.f32.mrb[0].mxu0
    %v366 = vadd.f32 %v288, %v365
    %v367 = vpop.f32.mrb[0].mxu0
    %368 = vmatprep.mubr.f32.mxu0 0.0
    %369 = vmatmul.mubr.f32.gmra.mrb[0].mxu0 %v101
    %v370 = vpop.f32.mrb[0].mxu0
    %v371 = vadd.f32 %v282, %v370
    %v372 = vpop.f32.mrb[0].mxu0
    %373 = vdwg.mxu0
    %vm378 = vcmask 1046528
    %v379 = vrot.slane %v254, 1
    %v380 = vrot.slane %v259, 1
    %v381 = vsel %vm378, %v379, %v380
    %v382 = vrot.slane %v264, 1
    %v383 = vrot.slane %v269, 1
    %v384 = vsel %vm378, %v382, %v383
    %v389 = vsel %vm378, %v380, 0.0
    %v390 = vsel %vm378, %v383, 0.0
    %v391 = vadd.f32 %v356, %v381
    %v392 = vadd.f32 %v361, %v389
    %v393 = vadd.f32 %v366, %v384
    %v394 = vadd.f32 %v371, %v390
    %v395 = vadd.f32 %v391, %v392
    %v396 = vadd.f32 %v395, %v393
    %v397 = vadd.f32 %v396, %v394
    %v398 = vrot.slane %v397, 4
    %v399 = vadd.f32 %v397, %v398
    %v400 = vrot.slane %v399, 2
    %v401 = vadd.f32 %v399, %v400
    %v402 = vrot.slane %v401, 1
    %v403 = vadd.f32 %v401, %v402
    %404 = vrot.lane.b32.xlu0 %v403, 8
    %v405 = vpop.permute.xlu0 %404
    %v406 = vadd.f32 %v403, %v405
    %407 = vrot.lane.b32.xlu0 %v406, 16
    %v408 = vpop.permute.xlu0 %407
    %v409 = vadd.f32 %v406, %v408
    %410 = vrot.lane.b32.xlu0 %v409, 32
    %v411 = vpop.permute.xlu0 %410
    %v412 = vadd.f32 %v409, %v411
    %413 = vrot.lane.b32.xlu0 %v412, 64
    %v414 = vpop.permute.xlu0 %413
    %v415 = vadd.f32 %v412, %v414
    %v416 = vmul.f32 %v415, 0.001953125
    %v417 = vlaneseq
    %v418 = vshrl.u32 %v417, 7
    %v419 = vsub.s32 0, %v418
    %v420 = vrot.slane %v416, %v419
    %v421 = vsub.f32 %v391, %v420
    %v422 = vsub.f32 %v392, %v420
    %v423 = vsub.f32 %v393, %v420
    %v424 = vsub.f32 %v394, %v420
    %v425 = vmul.f32 %v421, %v421
    %v426 = vmul.f32 %v422, %v422
    %v427 = vmul.f32 %v423, %v423
    %v428 = vmul.f32 %v424, %v424
    %v429 = vadd.f32 %v425, %v426
    %v430 = vadd.f32 %v429, %v427
    %v431 = vadd.f32 %v430, %v428
    %v432 = vrot.slane %v431, 4
    %v433 = vadd.f32 %v431, %v432
    %v434 = vrot.slane %v433, 2
    %v435 = vadd.f32 %v433, %v434
    %v436 = vrot.slane %v435, 1
    %v437 = vadd.f32 %v435, %v436
    %438 = vrot.lane.b32.xlu0 %v437, 8
    %v439 = vpop.permute.xlu0 %438
    %v440 = vadd.f32 %v437, %v439
    %441 = vrot.lane.b32.xlu0 %v440, 16
    %v442 = vpop.permute.xlu0 %441
    %v443 = vadd.f32 %v440, %v442
    %444 = vrot.lane.b32.xlu0 %v443, 32
    %v445 = vpop.permute.xlu0 %444
    %v446 = vadd.f32 %v443, %v445
    %447 = vrot.lane.b32.xlu0 %v446, 64
    %v448 = vpop.permute.xlu0 %447
    %v449 = vadd.f32 %v446, %v448
    %v450 = vmul.f32 %v449, 0.001953125
    %v451 = vadd.f32 %v450, 1e-05
    %v452 = vrsqrt.pop %v451
    %v453 = vmul.f32 %v452, %v96
    %v454 = vlaneseq
    %v455 = vshrl.u32 %v454, 7
    %v456 = vsub.s32 0, %v455
    %v457 = vrot.slane %v453, %v456
    %v458 = vmul.f32 %v421, %v457
    %v459 = vmul.f32 %v422, %v457
    %v460 = vmul.f32 %v423, %v457
    %v461 = vmul.f32 %v424, %v457
    %v463 = vlaneseq
    %v464 = vshrl.u32 %v463, 7
    %v465 = vsub.s32 0, %v464
    %v466 = vrot.slane %v97, %v465
    %v468 = vadd.f32 %v458, %v466
    %v469 = vadd.f32 %v459, %v466
    %v470 = vadd.f32 %v460, %v466
    %v471 = vadd.f32 %v461, %v466
    %v472 = vmax.f32 %v468, 0.0
    %v473 = vmax.f32 %v469, 0.0
    %v474 = vmax.f32 %v470, 0.0
    %v475 = vmax.f32 %v471, 0.0
    %476 = vmatprep.subr.mxu0 0.0
    %477 = vmatpush1.msra.mxu0 %v46
    %478 = vmatprep.subr.mxu0 0.0
    %479 = vmatpush1.msra.mxu0 %v47
    %480 = vmatprep.subr.mxu0 0.0
    %481 = vmatpush1.msra.mxu0 %v48
    %482 = vmatprep.subr.mxu0 0.0
    %483 = vmatpush1.msra.mxu0 %v49
    %484 = vmatprep.subr.mxu0 0.0
    %485 = vmatpush1.msra.mxu0 %v50
    %486 = vmatprep.subr.mxu0 0.0
    %487 = vmatpush1.msra.mxu0 %v51
    %488 = vmatprep.subr.mxu0 0.0
    %489 = vmatpush1.msra.mxu0 %v52
    %490 = vmatprep.subr.mxu0 0.0
    %491 = vmatpush1.msra.mxu0 %v53
    %492 = vmatprep.subr.mxu0 0.0
    %493 = vmatpush1.msra.mxu0 %v54
    %494 = vmatprep.subr.mxu0 0.0
    %495 = vmatpush1.msra.mxu0 %v55
    %496 = vmatprep.subr.mxu0 0.0
    %497 = vmatpush1.msra.mxu0 %v56
    %498 = vmatprep.subr.mxu0 0.0
    %499 = vmatpush1.msra.mxu0 %v57
    %500 = vmatprep.subr.mxu0 0.0
    %501 = vmatpush1.msra.mxu0 %v58
    %502 = vmatprep.subr.mxu0 0.0
    %503 = vmatpush1.msra.mxu0 %v59
    %504 = vmatprep.subr.mxu0 0.0
    %505 = vmatpush1.msra.mxu0 %v60
    %506 = vmatprep.subr.mxu0 0.0
    %507 = vmatpush1.msra.mxu0 %v61
    %508 = vmatprep.subr.mxu0 0.0
    %509 = vmatpush1.msra.mxu0 0.0
    %510 = vmatprep.subr.mxu0 0.0
    %511 = vmatpush1.msra.mxu0 0.0
    %512 = vmatprep.subr.mxu0 0.0
    %513 = vmatpush1.msra.mxu0 0.0
    %514 = vmatprep.subr.mxu0 0.0
    %515 = vmatpush1.msra.mxu0 0.0
    %516 = vmatprep.subr.mxu0 0.0
    %517 = vmatpush1.msra.mxu0 0.0
    %518 = vmatprep.subr.mxu0 0.0
    %519 = vmatpush1.msra.mxu0 0.0
    %520 = vmatprep.subr.mxu0 0.0
    %521 = vmatpush1.msra.mxu0 0.0
    %522 = vmatprep.subr.mxu0 0.0
    %523 = vmatpush1.msra.mxu0 0.0
    %524 = vmatprep.subr.mxu0 0.0
    %525 = vmatpush1.msra.mxu0 0.0
    %526 = vmatprep.subr.mxu0 0.0
    %527 = vmatpush1.msra.mxu0 0.0
    %528 = vmatprep.subr.mxu0 0.0
    %529 = vmatpush1.msra.mxu0 0.0
    %530 = vmatprep.subr.mxu0 0.0
    %531 = vmatpush1.msra.mxu0 0.0
    %532 = vmatprep.subr.mxu0 0.0
    %533 = vmatpush1.msra.mxu0 0.0
    %534 = vmatprep.subr.mxu0 0.0
    %535 = vmatpush1.msra.mxu0 0.0
    %536 = vmatprep.subr.mxu0 0.0
    %537 = vmatpush1.msra.mxu0 0.0
    %538 = vmatprep.subr.mxu0 0.0
    %539 = vmatpush1.msra.mxu0 0.0
    %540 = vmatprep.mubr.f32.mxu0 0.0
    %541 = vmatmul.mubr.f32.gmra.mrb[0].mxu0 %v472
    %v542 = vpop.f32.mrb[0].mxu0
    %v543 = vadd.f32 0.0, %v542
    %v544 = vpop.f32.mrb[0].mxu0
    %545 = vmatprep.mubr.f32.mxu0 0.0
    %546 = vmatmul.mubr.f32.gmra.mrb[0].mxu0 %v473
    %v547 = vpop.f32.mrb[0].mxu0
    %v548 = vadd.f32 0.0, %v547
    %v549 = vpop.f32.mrb[0].mxu0
    %550 = vmatprep.mubr.f32.mxu0 0.0
    %551 = vmatmul.mubr.f32.gmra.mrb[0].mxu0 %v474
    %v552 = vpop.f32.mrb[0].mxu0
    %v553 = vadd.f32 0.0, %v552
    %v554 = vpop.f32.mrb[0].mxu0
    %555 = vmatprep.mubr.f32.mxu0 0.0
    %556 = vmatmul.mubr.f32.gmra.mrb[0].mxu0 %v475
    %v557 = vpop.f32.mrb[0].mxu0
    %v558 = vadd.f32 0.0, %v557
    %v559 = vpop.f32.mrb[0].mxu0
    %560 = vdwg.mxu0
    %561 = vmatprep.subr.mxu0 0.0
    %562 = vmatpush1.msra.mxu0 %v80
    %563 = vmatprep.subr.mxu0 0.0
    %564 = vmatpush1.msra.mxu0 %v81
    %565 = vmatprep.subr.mxu0 0.0
    %566 = vmatpush1.msra.mxu0 %v82
    %567 = vmatprep.subr.mxu0 0.0
    %568 = vmatpush1.msra.mxu0 %v83
    %569 = vmatprep.subr.mxu0 0.0
    %570 = vmatpush1.msra.mxu0 %v84
    %571 = vmatprep.subr.mxu0 0.0
    %572 = vmatpush1.msra.mxu0 %v85
    %573 = vmatprep.subr.mxu0 0.0
    %574 = vmatpush1.msra.mxu0 %v86
    %575 = vmatprep.subr.mxu0 0.0
    %576 = vmatpush1.msra.mxu0 %v87
    %577 = vmatprep.subr.mxu0 0.0
    %578 = vmatpush1.msra.mxu0 %v88
    %579 = vmatprep.subr.mxu0 0.0
    %580 = vmatpush1.msra.mxu0 %v89
    %581 = vmatprep.subr.mxu0 0.0
    %582 = vmatpush1.msra.mxu0 %v90
    %583 = vmatprep.subr.mxu0 0.0
    %584 = vmatpush1.msra.mxu0 %v91
    %585 = vmatprep.subr.mxu0 0.0
    %586 = vmatpush1.msra.mxu0 %v92
    %587 = vmatprep.subr.mxu0 0.0
    %588 = vmatpush1.msra.mxu0 %v93
    %589 = vmatprep.subr.mxu0 0.0
    %590 = vmatpush1.msra.mxu0 %v94
    %591 = vmatprep.subr.mxu0 0.0
    %592 = vmatpush1.msra.mxu0 %v95
    %593 = vmatprep.subr.mxu0 0.0
    %594 = vmatpush1.msra.mxu0 0.0
    %595 = vmatprep.subr.mxu0 0.0
    %596 = vmatpush1.msra.mxu0 0.0
    %597 = vmatprep.subr.mxu0 0.0
    %598 = vmatpush1.msra.mxu0 0.0
    %599 = vmatprep.subr.mxu0 0.0
    %600 = vmatpush1.msra.mxu0 0.0
    %601 = vmatprep.subr.mxu0 0.0
    %602 = vmatpush1.msra.mxu0 0.0
    %603 = vmatprep.subr.mxu0 0.0
    %604 = vmatpush1.msra.mxu0 0.0
    %605 = vmatprep.subr.mxu0 0.0
    %606 = vmatpush1.msra.mxu0 0.0
    %607 = vmatprep.subr.mxu0 0.0
    %608 = vmatpush1.msra.mxu0 0.0
    %609 = vmatprep.subr.mxu0 0.0
    %610 = vmatpush1.msra.mxu0 0.0
    %611 = vmatprep.subr.mxu0 0.0
    %612 = vmatpush1.msra.mxu0 0.0
    %613 = vmatprep.subr.mxu0 0.0
    %614 = vmatpush1.msra.mxu0 0.0
    %615 = vmatprep.subr.mxu0 0.0
    %616 = vmatpush1.msra.mxu0 0.0
    %617 = vmatprep.subr.mxu0 0.0
    %618 = vmatpush1.msra.mxu0 0.0
    %619 = vmatprep.subr.mxu0 0.0
    %620 = vmatpush1.msra.mxu0 0.0
    %621 = vmatprep.subr.mxu0 0.0
    %622 = vmatpush1.msra.mxu0 0.0
    %623 = vmatprep.subr.mxu0 0.0
    %624 = vmatpush1.msra.mxu0 0.0
    %625 = vmatprep.mubr.f32.mxu0 0.0
    %626 = vmatmul.mubr.f32.gmra.mrb[0].mxu0 %v472
    %v627 = vpop.f32.mrb[0].mxu0
    %v628 = vadd.f32 0.0, %v627
    %v629 = vpop.f32.mrb[0].mxu0
    %630 = vmatprep.mubr.f32.mxu0 0.0
    %631 = vmatmul.mubr.f32.gmra.mrb[0].mxu0 %v473
    %v632 = vpop.f32.mrb[0].mxu0
    %v633 = vadd.f32 0.0, %v632
    %v634 = vpop.f32.mrb[0].mxu0
    %635 = vmatprep.mubr.f32.mxu0 0.0
    %636 = vmatmul.mubr.f32.gmra.mrb[0].mxu0 %v474
    %v637 = vpop.f32.mrb[0].mxu0
    %v638 = vadd.f32 0.0, %v637
    %v639 = vpop.f32.mrb[0].mxu0
    %640 = vmatprep.mubr.f32.mxu0 0.0
    %641 = vmatmul.mubr.f32.gmra.mrb[0].mxu0 %v475
    %v642 = vpop.f32.mrb[0].mxu0
    %v643 = vadd.f32 0.0, %v642
    %v644 = vpop.f32.mrb[0].mxu0
    %645 = vdwg.mxu0
    %v650 = vrot.slane %v543, 7
    %v651 = vrot.slane %v548, 7
    %v652 = vsel %vm276, %v650, %v651
    %v653 = vrot.slane %v553, 7
    %v654 = vrot.slane %v558, 7
    %v655 = vsel %vm276, %v653, %v654
    %v660 = vsel %vm276, 0.0, %v650
    %v661 = vsel %vm276, 0.0, %v653
    %662 = vmatprep.subr.mxu0 0.0
    %663 = vmatpush1.msra.mxu0 %v63
    %664 = vmatprep.subr.mxu0 0.0
    %665 = vmatpush1.msra.mxu0 %v64
    %666 = vmatprep.subr.mxu0 0.0
    %667 = vmatpush1.msra.mxu0 %v65
    %668 = vmatprep.subr.mxu0 0.0
    %669 = vmatpush1.msra.mxu0 %v66
    %670 = vmatprep.subr.mxu0 0.0
    %671 = vmatpush1.msra.mxu0 %v67
    %672 = vmatprep.subr.mxu0 0.0
    %673 = vmatpush1.msra.mxu0 %v68
    %674 = vmatprep.subr.mxu0 0.0
    %675 = vmatpush1.msra.mxu0 %v69
    %676 = vmatprep.subr.mxu0 0.0
    %677 = vmatpush1.msra.mxu0 %v70
    %678 = vmatprep.subr.mxu0 0.0
    %679 = vmatpush1.msra.mxu0 %v71
    %680 = vmatprep.subr.mxu0 0.0
    %681 = vmatpush1.msra.mxu0 %v72
    %682 = vmatprep.subr.mxu0 0.0
    %683 = vmatpush1.msra.mxu0 %v73
    %684 = vmatprep.subr.mxu0 0.0
    %685 = vmatpush1.msra.mxu0 %v74
    %686 = vmatprep.subr.mxu0 0.0
    %687 = vmatpush1.msra.mxu0 %v75
    %688 = vmatprep.subr.mxu0 0.0
    %689 = vmatpush1.msra.mxu0 %v76
    %690 = vmatprep.subr.mxu0 0.0
    %691 = vmatpush1.msra.mxu0 %v77
    %692 = vmatprep.subr.mxu0 0.0
    %693 = vmatpush1.msra.mxu0 %v78
    %694 = vmatprep.subr.mxu0 0.0
    %695 = vmatpush1.msra.mxu0 0.0
    %696 = vmatprep.subr.mxu0 0.0
    %697 = vmatpush1.msra.mxu0 0.0
    %698 = vmatprep.subr.mxu0 0.0
    %699 = vmatpush1.msra.mxu0 0.0
    %700 = vmatprep.subr.mxu0 0.0
    %701 = vmatpush1.msra.mxu0 0.0
    %702 = vmatprep.subr.mxu0 0.0
    %703 = vmatpush1.msra.mxu0 0.0
    %704 = vmatprep.subr.mxu0 0.0
    %705 = vmatpush1.msra.mxu0 0.0
    %706 = vmatprep.subr.mxu0 0.0
    %707 = vmatpush1.msra.mxu0 0.0
    %708 = vmatprep.subr.mxu0 0.0
    %709 = vmatpush1.msra.mxu0 0.0
    %710 = vmatprep.subr.mxu0 0.0
    %711 = vmatpush1.msra.mxu0 0.0
    %712 = vmatprep.subr.mxu0 0.0
    %713 = vmatpush1.msra.mxu0 0.0
    %714 = vmatprep.subr.mxu0 0.0
    %715 = vmatpush1.msra.mxu0 0.0
    %716 = vmatprep.subr.mxu0 0.0
    %717 = vmatpush1.msra.mxu0 0.0
    %718 = vmatprep.subr.mxu0 0.0
    %719 = vmatpush1.msra.mxu0 0.0
    %720 = vmatprep.subr.mxu0 0.0
    %721 = vmatpush1.msra.mxu0 0.0
    %722 = vmatprep.subr.mxu0 0.0
    %723 = vmatpush1.msra.mxu0 0.0
    %724 = vmatprep.subr.mxu0 0.0
    %725 = vmatpush1.msra.mxu0 0.0
    %726 = vmatprep.mubr.f32.mxu0 0.0
    %727 = vmatmul.mubr.f32.gmra.mrb[0].mxu0 %v472
    %v728 = vpop.f32.mrb[0].mxu0
    %v729 = vadd.f32 %v660, %v728
    %v730 = vpop.f32.mrb[0].mxu0
    %731 = vmatprep.mubr.f32.mxu0 0.0
    %732 = vmatmul.mubr.f32.gmra.mrb[0].mxu0 %v473
    %v733 = vpop.f32.mrb[0].mxu0
    %v734 = vadd.f32 %v652, %v733
    %v735 = vpop.f32.mrb[0].mxu0
    %736 = vmatprep.mubr.f32.mxu0 0.0
    %737 = vmatmul.mubr.f32.gmra.mrb[0].mxu0 %v474
    %v738 = vpop.f32.mrb[0].mxu0
    %v739 = vadd.f32 %v661, %v738
    %v740 = vpop.f32.mrb[0].mxu0
    %741 = vmatprep.mubr.f32.mxu0 0.0
    %742 = vmatmul.mubr.f32.gmra.mrb[0].mxu0 %v475
    %v743 = vpop.f32.mrb[0].mxu0
    %v744 = vadd.f32 %v655, %v743
    %v745 = vpop.f32.mrb[0].mxu0
    %746 = vdwg.mxu0
    %v751 = vrot.slane %v628, 1
    %v752 = vrot.slane %v633, 1
    %v753 = vsel %vm378, %v751, %v752
    %v754 = vrot.slane %v638, 1
    %v755 = vrot.slane %v643, 1
    %v756 = vsel %vm378, %v754, %v755
    %v761 = vsel %vm378, %v752, 0.0
    %v762 = vsel %vm378, %v755, 0.0
    %v763 = vadd.f32 %v729, %v753
    %v764 = vadd.f32 %v734, %v761
    %v765 = vadd.f32 %v739, %v756
    %v766 = vadd.f32 %v744, %v762
    %v767 = vadd.f32 %v763, %v764
    %v768 = vadd.f32 %v767, %v765
    %v769 = vadd.f32 %v768, %v766
    %v770 = vrot.slane %v769, 4
    %v771 = vadd.f32 %v769, %v770
    %v772 = vrot.slane %v771, 2
    %v773 = vadd.f32 %v771, %v772
    %v774 = vrot.slane %v773, 1
    %v775 = vadd.f32 %v773, %v774
    %776 = vrot.lane.b32.xlu0 %v775, 8
    %v777 = vpop.permute.xlu0 %776
    %v778 = vadd.f32 %v775, %v777
    %779 = vrot.lane.b32.xlu0 %v778, 16
    %v780 = vpop.permute.xlu0 %779
    %v781 = vadd.f32 %v778, %v780
    %782 = vrot.lane.b32.xlu0 %v781, 32
    %v783 = vpop.permute.xlu0 %782
    %v784 = vadd.f32 %v781, %v783
    %785 = vrot.lane.b32.xlu0 %v784, 64
    %v786 = vpop.permute.xlu0 %785
    %v787 = vadd.f32 %v784, %v786
    %v788 = vmul.f32 %v787, 0.001953125
    %v789 = vlaneseq
    %v790 = vshrl.u32 %v789, 7
    %v791 = vsub.s32 0, %v790
    %v792 = vrot.slane %v788, %v791
    %v793 = vsub.f32 %v763, %v792
    %v794 = vsub.f32 %v764, %v792
    %v795 = vsub.f32 %v765, %v792
    %v796 = vsub.f32 %v766, %v792
    %v797 = vmul.f32 %v793, %v793
    %v798 = vmul.f32 %v794, %v794
    %v799 = vmul.f32 %v795, %v795
    %v800 = vmul.f32 %v796, %v796
    %v801 = vadd.f32 %v797, %v798
    %v802 = vadd.f32 %v801, %v799
    %v803 = vadd.f32 %v802, %v800
    %v804 = vrot.slane %v803, 4
    %v805 = vadd.f32 %v803, %v804
    %v806 = vrot.slane %v805, 2
    %v807 = vadd.f32 %v805, %v806
    %v808 = vrot.slane %v807, 1
    %v809 = vadd.f32 %v807, %v808
    %810 = vrot.lane.b32.xlu0 %v809, 8
    %v811 = vpop.permute.xlu0 %810
    %v812 = vadd.f32 %v809, %v811
    %813 = vrot.lane.b32.xlu0 %v812, 16
    %v814 = vpop.permute.xlu0 %813
    %v815 = vadd.f32 %v812, %v814
    %816 = vrot.lane.b32.xlu0 %v815, 32
    %v817 = vpop.permute.xlu0 %816
    %v818 = vadd.f32 %v815, %v817
    %819 = vrot.lane.b32.xlu0 %v818, 64
    %v820 = vpop.permute.xlu0 %819
    %v821 = vadd.f32 %v818, %v820
    %v822 = vmul.f32 %v821, 0.001953125
    %v823 = vadd.f32 %v822, 1e-05
    %v824 = vrsqrt.pop %v823
    %v825 = vmul.f32 %v824, %v96
    %v826 = vlaneseq
    %v827 = vshrl.u32 %v826, 7
    %v828 = vsub.s32 0, %v827
    %v829 = vrot.slane %v825, %v828
    %v830 = vmul.f32 %v793, %v829
    %v831 = vmul.f32 %v794, %v829
    %v832 = vmul.f32 %v795, %v829
    %v833 = vmul.f32 %v796, %v829
    %v834 = vadd.f32 %v830, %v466
    %v835 = vadd.f32 %v831, %v466
    %v836 = vadd.f32 %v832, %v466
    %v837 = vadd.f32 %v833, %v466
    %v838 = vmax.f32 %v834, 0.0
    %v839 = vmax.f32 %v835, 0.0
    %v840 = vmax.f32 %v836, 0.0
    %v841 = vmax.f32 %v837, 0.0
    %v842 = vadd.f32 %v838, %v98
    %v843 = vadd.f32 %v839, %v99
    %v844 = vadd.f32 %v840, %v100
    %v845 = vadd.f32 %v841, %v101
    %846 = vst [vmem:[#allocation7] sm:$0xff] %v842
    %847 = vst [vmem:[#allocation7 + $0x8] sm:$0xff] %v843
    %848 = vst [vmem:[#allocation7 + $0x10] sm:$0xff] %v844
    %849 = vst [vmem:[#allocation7 + $0x18] sm:$0xff] %v845
    // Predicated region
    $region26: #{tpu_custom_call.1} parent=1 // pred_check
      _
    $region27: #{tpu_custom_call.1} parent=1 // pred_check_branch
      %851 = sbr.rel (0) target = $region29
    $region28: #{tpu_custom_call.1} parent=1 // pred_region
      %s853 = ssub.s32 512, 512
      %854 = vsyncadd [#allocation4], %s853
      %s855 = sshll.u32 [#allocation7], 4
      %s856 = int_to_ptr.vmem [resolvable:$true] %s855
      %861 = dma.vmem_to_hbm [thread:$0]  %s856, 512, %s4, [#allocation4], 128, 128, 8
    $region29: #{tpu_custom_call.1} parent=1 // pred_fallthru
      _
    // Predicated region
    $region30: #{tpu_custom_call.1} parent=1 // pred_check
      _
    $region31: #{tpu_custom_call.1} parent=1 // pred_check_branch
      %863 = sbr.rel (0) target = $region33
    $region32: #{tpu_custom_call.1} parent=1 // pred_region
      %864 = dma.done [#allocation4], 512
    $region33: #{tpu_custom_call.1} parent=1 // pred_fallthru
      _
    %865 = vsyncpa [#allocation3], 1
    %866 = vsyncpa [#allocation6], 1
    %867 = vsyncpa [#allocation4], 1

</llo_original>
